<compile_context>
chip_gen: v7x
topology: tpu7x:2x2x1
jax: 0.10.0
libtpu: 0.0.40
codegen_flags: <defaults>
</compile_context>

<pallas_src>
import jax
import jax.numpy as jnp
from jax import lax
from jax.experimental import pallas as pl
from jax.experimental.pallas import tpu as pltpu


# Contract the last dim of x [tm, tk] with the last dim of w [tn, tk]
# (PyTorch Linear weight layout, no host-side transpose).
_NT_DIMS = (((1,), (1,)), ((), ()))


# ---------------------------------------------------------------------------
# Kernels
# ---------------------------------------------------------------------------
def _linear_kernel_single(x_ref, w_ref, o_ref):
    # Whole reduction in one step: no accumulator, straight store.
    o_ref[...] = lax.dot_general(
        x_ref[...], w_ref[...],
        dimension_numbers=_NT_DIMS,
        preferred_element_type=jnp.float32,
    ).astype(o_ref.dtype)


def _linear_bias_kernel_single(x_ref, w_ref, b_ref, o_ref):
    acc = lax.dot_general(
        x_ref[...], w_ref[...],
        dimension_numbers=_NT_DIMS,
        preferred_element_type=jnp.float32,
    )
    o_ref[...] = (acc + b_ref[...].astype(jnp.float32)).astype(o_ref.dtype)


def _linear_kernel_multi(x_ref, w_ref, o_ref, acc_ref):
    # x_ref: (tm, tk)   w_ref: (tn, tk)   o_ref: (tm, tn)   acc_ref: (tm, tn) f32
    k = pl.program_id(2)

    @pl.when(k == 0)
    def _init():
        acc_ref[...] = jnp.zeros_like(acc_ref)

    acc_ref[...] += lax.dot_general(
        x_ref[...], w_ref[...],
        dimension_numbers=_NT_DIMS,
        preferred_element_type=jnp.float32,
    )

    @pl.when(k == pl.num_programs(2) - 1)
    def _finalize():
        o_ref[...] = acc_ref[...].astype(o_ref.dtype)


def _linear_bias_kernel_multi(x_ref, w_ref, b_ref, o_ref, acc_ref):
    k = pl.program_id(2)

    @pl.when(k == 0)
    def _init():
        acc_ref[...] = jnp.zeros_like(acc_ref)

    acc_ref[...] += lax.dot_general(
        x_ref[...], w_ref[...],
        dimension_numbers=_NT_DIMS,
        preferred_element_type=jnp.float32,
    )

    @pl.when(k == pl.num_programs(2) - 1)
    def _finalize():
        o_ref[...] = (acc_ref[...] + b_ref[...].astype(jnp.float32)).astype(o_ref.dtype)


# ---------------------------------------------------------------------------
# Tile selection
# ---------------------------------------------------------------------------
def _round_up(v: int, m: int) -> int:
    return ((v + m - 1) // m) * m


def _pick_m_tile(dim: int, max_tile: int) -> int:
    """Batch tile: full dim if it fits, else prefer 128-aligned exact divisors.

    Partial last blocks along M are safe: padded rows are never written back."""
    max_tile = max(8, (max_tile // 8) * 8)
    if dim <= max_tile:
        return dim
    start = (min(max_tile, dim) // 128) * 128
    for t in range(start, 127, -128):
        if dim % t == 0:
            return t
    return (max_tile // 128) * 128 if max_tile >= 128 else max_tile


def _pick_n_tile(dim: int, max_tile: int) -> int:
    """Output-feature tile; `dim` is already padded to a multiple of 128."""
    max_tile = max(128, (max_tile // 128) * 128)
    if dim <= max_tile:
        return dim
    for t in range(max_tile, 127, -128):
        if dim % t == 0:
            return t
    return max_tile  # partial last block (never written back)


def _pick_k_tile(dim: int, max_tile: int) -> tuple[int, int]:
    """Return (tk, K_padded). Caller zero-pads K when K_padded > dim.

    The K tile must divide the (possibly padded) K exactly, since the grid
    accumulates over it; zero padding contributes nothing to the dot."""
    max_tile = max(128, (max_tile // 128) * 128)
    if dim <= max_tile:
        return dim, dim
    for t in range(max_tile, 127, -128):
        if dim % t == 0:
            return t, dim
    k_pad = _round_up(dim, 128)
    for t in range(max_tile, 127, -128):
        if k_pad % t == 0:
            return t, k_pad
    return 128, k_pad  # 128 always divides k_pad


# ---------------------------------------------------------------------------
# Wrapper
# ---------------------------------------------------------------------------
def ridge_block_forward(
    x: jax.Array,
    weight: jax.Array,
    bias: jax.Array | None = None,
    *,
    tile_m: int = 1024,
    tile_n: int = 512,
    tile_k: int = 512,
) -> jax.Array:
    """y = x @ weight.T (+ bias)  — torch.nn.Linear forward.

    x:      [B, in_features]
    weight: [out_features, in_features]  (PyTorch layout, NOT transposed)
    bias:   optional [out_features]
    """
    B, K = x.shape
    N, K_w = weight.shape
    assert K == K_w, "in_features mismatch between x and weight"
    if bias is not None:
        assert bias.shape == (N,)
    out_dtype = x.dtype
    itemsize = jnp.dtype(out_dtype).itemsize

    # --- Lane-dense N: pad out_features to a multiple of 128 (zeros). -------
    # (In production, store the pre-padded weight/bias at model init instead.)
    n_pad = _round_up(N, 128)
    if n_pad != N:
        weight = jnp.pad(weight, ((0, n_pad - N), (0, 0)))
        if bias is not None:
            bias = jnp.pad(bias, (0, n_pad - N))

    # --- K tiling (pad K only if no 128-aligned exact divisor exists). ------
    tk, k_pad = _pick_k_tile(K, tile_k)
    if k_pad != K:
        x = jnp.pad(x, ((0, 0), (0, k_pad - K)))
        weight = jnp.pad(weight, ((0, 0), (0, k_pad - K)))

    tm = _pick_m_tile(B, tile_m)
    tn = _pick_n_tile(n_pad, tile_n)
    m_blocks = pl.cdiv(B, tm)
    n_blocks = pl.cdiv(n_pad, tn)
    k_steps = k_pad // tk

    # --- Ensure >= 2 independent grid blocks so both v7x TensorCores run. ---
    # (Measured ~neutral on single-TC v5e/v6e: one extra ~0.35us grid step.)
    if m_blocks * n_blocks == 1:
        if B >= 16:
            tm = _round_up(pl.cdiv(B, 2), 8)
            m_blocks = pl.cdiv(B, tm)
        elif n_pad >= 256:
            tn = _round_up(n_pad // 2, 128)
            n_blocks = pl.cdiv(n_pad, tn)

    has_bias = bias is not None
    inputs = [x, weight] + ([bias.reshape(1, n_pad)] if has_bias else [])

    # --- Specs: single-K fast path (no accumulator) vs. accumulating path. --
    if k_steps == 1:
        kernel = _linear_bias_kernel_single if has_bias else _linear_kernel_single
        grid = (m_blocks, n_blocks)
        in_specs = [
            pl.BlockSpec((tm, tk), lambda i, j: (i, 0)),
            pl.BlockSpec((tn, tk), lambda i, j: (j, 0)),
        ]
        if has_bias:
            in_specs.append(pl.BlockSpec((1, tn), lambda i, j: (0, j)))
        out_specs = pl.BlockSpec((tm, tn), lambda i, j: (i, j))
        scratch_shapes = []
        dim_sem = ("parallel", "parallel")
        acc_bytes = 0
    else:
        kernel = _linear_bias_kernel_multi if has_bias else _linear_kernel_multi
        grid = (m_blocks, n_blocks, k_steps)
        in_specs = [
            pl.BlockSpec((tm, tk), lambda i, j, k: (i, k)),
            pl.BlockSpec((tn, tk), lambda i, j, k: (j, k)),
        ]
        if has_bias:
            in_specs.append(pl.BlockSpec((1, tn), lambda i, j, k: (0, j)))
        out_specs = pl.BlockSpec((tm, tn), lambda i, j, k: (i, j))
        scratch_shapes = [pltpu.VMEM((tm, tn), jnp.float32)]
        dim_sem = ("parallel", "parallel", "arbitrary")
        acc_bytes = tm * tn * 4

    # --- VMEM budget: actual double-buffered tile footprint + margin, -------
    # --- capped below v7x's 64 MiB physical VMEM.                     -------
    tile_bytes = (tm * tk + tn * tk + tm * tn + (tn if has_bias else 0)) * itemsize
    vmem_need = 2 * tile_bytes + acc_bytes
    vmem_limit = int(min(48 * 1024 * 1024, max(vmem_need + (8 << 20), 32 << 20)))

    # --- Cost estimate: include x / weight re-reads across N / M blocks. ----
    cost = pl.CostEstimate(
        flops=2 * B * k_pad * n_pad,
        transcendentals=0,
        bytes_accessed=(
            x.size * itemsize * n_blocks
            + weight.size * itemsize * m_blocks
            + B * n_pad * itemsize
            + (n_pad * itemsize if has_bias else 0)
        ),
    )

    out = pl.pallas_call(
        kernel,
        out_shape=jax.ShapeDtypeStruct((B, n_pad), out_dtype),
        grid_spec=pltpu.PrefetchScalarGridSpec(
            num_scalar_prefetch=0,
            grid=grid,
            in_specs=in_specs,
            out_specs=out_specs,
            scratch_shapes=scratch_shapes,
        ),
        compiler_params=pltpu.CompilerParams(
            dimension_semantics=dim_sem,
            vmem_limit_bytes=vmem_limit,
        ),
        cost_estimate=cost,
    )(*inputs)

    return out[:, :N] if n_pad != N else out


# ---------------------------------------------------------------------------
# Demo / correctness check
# ---------------------------------------------------------------------------
if __name__ == "__main__":
    key = jax.random.PRNGKey(0)

    # --- Small config matching the module defaults (bias=False). -----------
    batch, in_features, out_features = 8, 32, 16
    kx, kw, kb, kx2, kw2, kb2 = jax.random.split(key, 6)

    x = jax.random.normal(kx, (batch, in_features), dtype=jnp.float32)
    bound = 1.0 / (in_features ** 0.5)  # mimic torch Linear uniform init range
    weight = jax.random.uniform(
        kw, (out_features, in_features), dtype=jnp.float32,
        minval=-bound, maxval=bound,
    )

    y = jax.block_until_ready(ridge_block_forward(x, weight))
    y_ref = x @ weight.T
    assert y.shape == (batch, out_features)
    assert jnp.allclose(y, y_ref, atol=1e-5, rtol=1e-5)

    # --- Bias path (module supports bias=True). -----------------------------
    bias = jax.random.uniform(
        kb, (out_features,), dtype=jnp.float32, minval=-bound, maxval=bound
    )
    yb = jax.block_until_ready(ridge_block_forward(x, weight, bias))
    assert jnp.allclose(yb, x @ weight.T + bias, atol=1e-5, rtol=1e-5)

    # --- Larger, awkward shape: exercises padded-N (lane-dense output), -----
    # --- padded-K multi-step accumulation and the grid-split heuristic. -----
    B2, K2, N2 = 100, 200, 200
    x2 = jax.random.normal(kx2, (B2, K2), dtype=jnp.float32)
    w2 = jax.random.normal(kw2, (N2, K2), dtype=jnp.float32) * 0.05
    b2 = jax.random.normal(kb2, (N2,), dtype=jnp.float32) * 0.1
    y2 = jax.block_until_ready(
        ridge_block_forward(x2, w2, b2, tile_m=64, tile_n=128, tile_k=128)
    )
    assert y2.shape == (B2, N2)
    assert jnp.allclose(y2, x2 @ w2.T + b2, atol=1e-3, rtol=1e-3)

    print("KERNEL_OK")
</pallas_src>

<mosaic_0001>
module attributes {stable_mosaic.version = 11 : i64} {
  func.func @_linear_kernel_single(%arg0: i32, %arg1: i32, %arg2: memref<8x32xf32, #tpu.memory_space<vmem>>, %arg3: memref<128x32xf32, #tpu.memory_space<vmem>>, %arg4: memref<8x128xf32, #tpu.memory_space<vmem>>) attributes {dimension_semantics = [#tpu.dimension_semantics<parallel>, #tpu.dimension_semantics<parallel>], iteration_bounds = array<i64: 1, 1>, scalar_prefetch = 0 : i64, scratch_operands = 0 : i64, tpu.core_type = #tpu.core_type<tc>, window_params = [{transform_indices = @transform_0, window_bounds = array<i64: 8, 32>}, {transform_indices = @transform_1, window_bounds = array<i64: 128, 32>}, {transform_indices = @transform_2, window_bounds = array<i64: 8, 128>}]} {
    %c0 = arith.constant 0 : index
    %c0_0 = arith.constant 0 : index
    %0 = vector.load %arg2[%c0, %c0_0] : memref<8x32xf32, #tpu.memory_space<vmem>>, vector<8x32xf32>
    %c0_1 = arith.constant 0 : index
    %c0_2 = arith.constant 0 : index
    %1 = vector.load %arg3[%c0_1, %c0_2] : memref<128x32xf32, #tpu.memory_space<vmem>>, vector<128x32xf32>
    %cst = arith.constant dense<0.000000e+00> : vector<8x128xf32>
    %2 = tpu.matmul %0, %1, %cst {dimension_numbers = #tpu.dot_dimension_numbers<[1], [1], [0], [0], [0, 0, 1, 0], [], []>} : vector<8x32xf32>, vector<128x32xf32>, vector<8x128xf32> -> vector<8x128xf32>
    %c0_3 = arith.constant 0 : index
    %c0_4 = arith.constant 0 : index
    %3 = vector.load %arg4[%c0_3, %c0_4] : memref<8x128xf32, #tpu.memory_space<vmem>>, vector<8x128xf32>
    tpu.vector_store %arg4[%c0_3, %c0_4], %2 {strides = array<i32>} : memref<8x128xf32, #tpu.memory_space<vmem>>, vector<8x128xf32>,
    return
  }
  func.func @transform_0(%arg0: i32, %arg1: i32) -> (i32, i32) {
    %c0_i32 = arith.constant 0 : i32
    %c0_i32_0 = arith.constant 0 : i32
    return %arg0, %c0_i32 : i32, i32
  }
  func.func @transform_1(%arg0: i32, %arg1: i32) -> (i32, i32) {
    %c0_i32 = arith.constant 0 : i32
    %c0_i32_0 = arith.constant 0 : i32
    return %arg1, %c0_i32 : i32, i32
  }
  func.func @transform_2(%arg0: i32, %arg1: i32) -> (i32, i32) {
    %c0_i32 = arith.constant 0 : i32
    return %arg0, %arg1 : i32, i32
  }
}

</mosaic_0001>

<llo_original>
// kernel: tpu_custom_call.1
$region0: #{tpu_custom_call.1}
  #allocation0 [shape = 'u32[]', space=smem, size = 0x4, offset = 0x4, fixed_abs, tag = 'smem constant byte address 0x4 - core index']
  #allocation1 [shape = 'u32[144,128]{1,0:T(1,128)}', space=vmem, size = 0x12000, scoped, tag = 'internal scratch']
  %s0 = inlined_call_operand.vmem [shape: f32[8,32], index: 0, kind: input, shape index: {}]
  %s1 = inlined_call_operand.vmem [shape: f32[128,32], index: 1, kind: input, shape index: {}]
  %s2 = inlined_call_operand.hbm [shape: f32[8,128], index: 2, kind: output, shape index: {}]
  %s3 = sld [smem:[#allocation0]]
  $region18: #{tpu_custom_call.1} parent=0
    _
  %s5 = ssub.s32 1, %s3
  %s6 = scalar_select 0, %s5, %s3
  $region1: #{tpu_custom_call.1} parent=0
    #allocation2 [shape = 'u8[4096]{0}', space=vmem, size = 0x1000, scoped, tag = 'output window, operand 0, single buffered']
    #allocation3 [shape = 's32[1]{0}', space=sflag, size = 0x4, scoped, tag = 'scoped memory for tpu_custom_call.1']
    %7 = vsyncpa [#allocation3], 0
    // Predicated region
    $region2: #{tpu_custom_call.1} parent=1 // pred_check
      _
    $region3: #{tpu_custom_call.1} parent=1 // pred_check_branch
      %9 = sbr.rel (0) target = $region5
    $region4: #{tpu_custom_call.1} parent=1 // pred_region
      _
    $region5: #{tpu_custom_call.1} parent=1 // pred_fallthru
      _
    // Predicated region
    $region6: #{tpu_custom_call.1} parent=1 // pred_check
      _
    $region7: #{tpu_custom_call.1} parent=1 // pred_check_branch
      %11 = sbr.rel (0) target = $region9
    $region8: #{tpu_custom_call.1} parent=1 // pred_region
      _
    $region9: #{tpu_custom_call.1} parent=1 // pred_fallthru
      _
    %v12 = vld [vmem:[%s0] sm:$0xff]
    %v13 = vld [vmem:[%s1] sm:$0xff]
    %v14 = vld [vmem:[%s1 + $0x8] sm:$0xff]
    %v15 = vld [vmem:[%s1 + $0x10] sm:$0xff]
    %v16 = vld [vmem:[%s1 + $0x18] sm:$0xff]
    %v17 = vld [vmem:[%s1 + $0x20] sm:$0xff]
    %v18 = vld [vmem:[%s1 + $0x28] sm:$0xff]
    %v19 = vld [vmem:[%s1 + $0x30] sm:$0xff]
    %v20 = vld [vmem:[%s1 + $0x38] sm:$0xff]
    %v21 = vld [vmem:[%s1 + $0x40] sm:$0xff]
    %v22 = vld [vmem:[%s1 + $0x48] sm:$0xff]
    %v23 = vld [vmem:[%s1 + $0x50] sm:$0xff]
    %v24 = vld [vmem:[%s1 + $0x58] sm:$0xff]
    %v25 = vld [vmem:[%s1 + $0x60] sm:$0xff]
    %v26 = vld [vmem:[%s1 + $0x68] sm:$0xff]
    %v27 = vld [vmem:[%s1 + $0x70] sm:$0xff]
    %v28 = vld [vmem:[%s1 + $0x78] sm:$0xff]
    %vm29 = vcmask 261120
    %v31 = vsel %vm29, %v12, 0
    %v34 = vsel %vm29, %v13, 0
    %v37 = vsel %vm29, %v14, 0
    %v40 = vsel %vm29, %v15, 0
    %v43 = vsel %vm29, %v16, 0
    %v46 = vsel %vm29, %v17, 0
    %v49 = vsel %vm29, %v18, 0
    %v52 = vsel %vm29, %v19, 0
    %v55 = vsel %vm29, %v20, 0
    %v58 = vsel %vm29, %v21, 0
    %v61 = vsel %vm29, %v22, 0
    %v64 = vsel %vm29, %v23, 0
    %v67 = vsel %vm29, %v24, 0
    %v70 = vsel %vm29, %v25, 0
    %v73 = vsel %vm29, %v26, 0
    %v76 = vsel %vm29, %v27, 0
    %v79 = vsel %vm29, %v28, 0
    %81 = vmatprep.subr.mxu0 0.0
    %82 = vmatpush1.xpose.msra.mxu0 %v34
    %83 = vmatprep.subr.mxu0 0.0
    %84 = vmatpush1.xpose.msra.mxu0 %v37
    %85 = vmatprep.subr.mxu0 0.0
    %86 = vmatpush1.xpose.msra.mxu0 %v40
    %87 = vmatprep.subr.mxu0 0.0
    %88 = vmatpush1.xpose.msra.mxu0 %v43
    %89 = vmatprep.subr.mxu0 0.0
    %90 = vmatpush1.xpose.msra.mxu0 %v46
    %91 = vmatprep.subr.mxu0 0.0
    %92 = vmatpush1.xpose.msra.mxu0 %v49
    %93 = vmatprep.subr.mxu0 0.0
    %94 = vmatpush1.xpose.msra.mxu0 %v52
    %95 = vmatprep.subr.mxu0 0.0
    %96 = vmatpush1.xpose.msra.mxu0 %v55
    %97 = vmatprep.subr.mxu0 0.0
    %98 = vmatpush1.xpose.msra.mxu0 %v58
    %99 = vmatprep.subr.mxu0 0.0
    %100 = vmatpush1.xpose.msra.mxu0 %v61
    %101 = vmatprep.subr.mxu0 0.0
    %102 = vmatpush1.xpose.msra.mxu0 %v64
    %103 = vmatprep.subr.mxu0 0.0
    %104 = vmatpush1.xpose.msra.mxu0 %v67
    %105 = vmatprep.subr.mxu0 0.0
    %106 = vmatpush1.xpose.msra.mxu0 %v70
    %107 = vmatprep.subr.mxu0 0.0
    %108 = vmatpush1.xpose.msra.mxu0 %v73
    %109 = vmatprep.subr.mxu0 0.0
    %110 = vmatpush1.xpose.msra.mxu0 %v76
    %111 = vmatprep.subr.mxu0 0.0
    %112 = vmatpush1.xpose.msra.mxu0 %v79
    %113 = vmatprep.subr.mxu0 0.0
    %114 = vmatpush1.xpose.msra.mxu0 0.0
    %115 = vmatprep.subr.mxu0 0.0
    %116 = vmatpush1.xpose.msra.mxu0 0.0
    %117 = vmatprep.subr.mxu0 0.0
    %118 = vmatpush1.xpose.msra.mxu0 0.0
    %119 = vmatprep.subr.mxu0 0.0
    %120 = vmatpush1.xpose.msra.mxu0 0.0
    %121 = vmatprep.subr.mxu0 0.0
    %122 = vmatpush1.xpose.msra.mxu0 0.0
    %123 = vmatprep.subr.mxu0 0.0
    %124 = vmatpush1.xpose.msra.mxu0 0.0
    %125 = vmatprep.subr.mxu0 0.0
    %126 = vmatpush1.xpose.msra.mxu0 0.0
    %127 = vmatprep.subr.mxu0 0.0
    %128 = vmatpush1.xpose.msra.mxu0 0.0
    %129 = vmatprep.subr.mxu0 0.0
    %130 = vmatpush1.xpose.msra.mxu0 0.0
    %131 = vmatprep.subr.mxu0 0.0
    %132 = vmatpush1.xpose.msra.mxu0 0.0
    %133 = vmatprep.subr.mxu0 0.0
    %134 = vmatpush1.xpose.msra.mxu0 0.0
    %135 = vmatprep.subr.mxu0 0.0
    %136 = vmatpush1.xpose.msra.mxu0 0.0
    %137 = vmatprep.subr.mxu0 0.0
    %138 = vmatpush1.xpose.msra.mxu0 0.0
    %139 = vmatprep.subr.mxu0 0.0
    %140 = vmatpush1.xpose.msra.mxu0 0.0
    %141 = vmatprep.subr.mxu0 0.0
    %142 = vmatpush1.xpose.msra.mxu0 0.0
    %143 = vmatprep.subr.mxu0 0.0
    %144 = vmatpush1.xpose.msra.mxu0 0.0
    %145 = vmatprep.mubr.f32.mxu0 0.0
    %146 = vmatmul.mubr.f32.gmra.mrb[0].mxu0 %v31
    %v147 = vpop.f32.mrb[0].mxu0
    %v148 = vadd.f32 0.0, %v147
    %v149 = vpop.f32.mrb[0].mxu0
    %150 = vdwg.mxu0
    %151 = vst [vmem:[#allocation2] sm:$0xff] %v148
    // Predicated region
    $region10: #{tpu_custom_call.1} parent=1 // pred_check
      _
    $region11: #{tpu_custom_call.1} parent=1 // pred_check_branch
      %153 = sbr.rel (0) target = $region13
    $region12: #{tpu_custom_call.1} parent=1 // pred_region
      %s155 = ssub.s32 128, 128
      %156 = vsyncadd [#allocation3], %s155
      %s158 = sshll.u32 [#allocation2], 4
      %s159 = int_to_ptr.vmem [resolvable:$true] %s158
      %161 = dma.vmem_to_hbm [thread:$0]  %s159, 128, %s2, [#allocation3]
    $region13: #{tpu_custom_call.1} parent=1 // pred_fallthru
      _
    // Predicated region
    $region14: #{tpu_custom_call.1} parent=1 // pred_check
      _
    $region15: #{tpu_custom_call.1} parent=1 // pred_check_branch
      %163 = sbr.rel (0) target = $region17
    $region16: #{tpu_custom_call.1} parent=1 // pred_region
      %164 = dma.done [#allocation3], 128
    $region17: #{tpu_custom_call.1} parent=1 // pred_fallthru
      _
    %165 = vsyncpa [#allocation3], 1

</llo_original>
